<compile_context>
chip_gen: v7x
topology: tpu7x:2x2x1
jax: 0.10.0
libtpu: 0.0.40
codegen_flags: <defaults>
</compile_context>

<pallas_src>
import math
from functools import partial

import jax
import jax.numpy as jnp
from jax import lax
from jax.experimental import pallas as pl
from jax.experimental.pallas import tpu as pltpu


def _round_up(x, m):
    return (x + m - 1) // m * m


# ---------------------------------------------------------------------------
# Kernel 1: support = X @ W_eff  (W_eff = weight * mask folded in the wrapper)
# ---------------------------------------------------------------------------
def _support_kernel(x_ref, w_ref, s_ref):
    s_ref[...] = jnp.dot(x_ref[...], w_ref[...],
                         preferred_element_type=jnp.float32).astype(s_ref.dtype)


# ---------------------------------------------------------------------------
# Kernel 2: out = adj @ support + bias
#   grid = (row tiles [parallel], reduction over adj columns [arbitrary, last])
# ---------------------------------------------------------------------------
def _aggregate_kernel(adj_ref, s_ref, b_ref, o_ref, *scratch,
                      tk, n_valid, mask_cols, support_resident):
    k = pl.program_id(1)
    nk = pl.num_programs(1)

    # f32 outputs accumulate straight into the resident output block
    # (its index map ignores k); otherwise use the f32 VMEM scratch.
    acc_ref = scratch[0] if scratch else o_ref

    adj_tile = adj_ref[...]
    if mask_cols:
        # The last reduction block can extend past adj's N columns; those
        # lanes are undefined, so zero them explicitly (cheap (1, TK) iota).
        col = k * tk + lax.broadcasted_iota(jnp.int32, (1, adj_tile.shape[1]), 1)
        adj_tile = jnp.where(col < n_valid, adj_tile, jnp.zeros_like(adj_tile))
    adj_tile = adj_tile.astype(s_ref.dtype)   # no-op when compute dtype == adj dtype

    if support_resident:
        # Whole support array lives in VMEM; take this reduction step's slice.
        off = pl.multiple_of(k * tk, 128)
        s_tile = s_ref[pl.ds(off, tk), :]
    else:
        s_tile = s_ref[...]

    prod = jnp.dot(adj_tile, s_tile, preferred_element_type=jnp.float32)

    @pl.when(k == 0)
    def _init():
        acc_ref[...] = jnp.zeros_like(acc_ref)

    acc_ref[...] += prod

    @pl.when(k == nk - 1)
    def _finalize():
        o_ref[...] = (acc_ref[...] + b_ref[...]).astype(o_ref.dtype)


# ---------------------------------------------------------------------------
# Wrapper reproducing Masked_GraphConvolution.forward
# ---------------------------------------------------------------------------
def masked_graph_convolution(x, adj, weight, bias=None, mask=None,
                             compute_dtype=jnp.float32):
    """x:(N,F_in)  adj:(N,N) dense  weight:(F_in,F_out)  bias:(F_out,)|None
    mask:(F_in,F_out)|None (None == mask_flag False).  Output dtype = x.dtype."""
    n, f_in = x.shape
    f_out = weight.shape[1]
    out_dtype = x.dtype
    cdt = jnp.dtype(compute_dtype)
    c_isz = cdt.itemsize
    adj_isz = jnp.dtype(adj.dtype).itemsize
    o_isz = jnp.dtype(out_dtype).itemsize
    acc_in_out = jnp.dtype(out_dtype) == jnp.dtype(jnp.float32)

    # ---- physical VMEM budget (v5e/v6e: 128 MiB, v7x: 64 MiB) --------------
    try:
        vmem_cap = int(pltpu.get_tpu_info().vmem_capacity_bytes)
    except Exception:
        vmem_cap = 64 * 1024 * 1024          # conservative (v7x) fallback
    budget = int(vmem_cap * 0.7)

    # ---- tile selection -----------------------------------------------------
    # TM: keep >= 2 row tiles so the "parallel" axis can span both v7x cores.
    tm = 512
    while tm > 128 and pl.cdiv(n, tm) < 2:
        tm //= 2
    tm = min(tm, _round_up(n, 8))

    # TK: ~4 MiB adjacency tile per pipeline buffer, multiple of 128 lanes.
    tk = max(128, ((4 << 20) // (tm * adj_isz)) // 128 * 128)
    tk = min(tk, _round_up(n, 128))
    if n >= 128:
        tk = min(tk, max(128, (n // 128) * 128))   # keep block <= adj column dim

    def _footprint(tm_, tk_, resident_):
        nk_pad_ = _round_up(n, tk_)
        fp = 2 * tm_ * tk_ * adj_isz                               # adj dbl buffer
        fp += (2 * nk_pad_ * f_out * c_isz if resident_            # resident support
               else 2 * tk_ * f_out * c_isz)                       # streamed support
        fp += 2 * tm_ * f_out * o_isz                              # output dbl buffer
        fp += 0 if acc_in_out else tm_ * f_out * 4                 # f32 scratch acc
        return fp + (1 << 20)                                      # bias / slack

    resident = 2 * _round_up(n, tk) * f_out * c_isz <= budget // 3
    while _footprint(tm, tk, resident) + (4 << 20) > budget and tk > 128:
        tk = max(128, tk // 2)
    if _footprint(tm, tk, resident) + (4 << 20) > budget:
        resident = False
    while _footprint(tm, tk, resident) + (4 << 20) > budget and tm > 128:
        tm = max(128, tm // 2)

    n_k_pad = _round_up(n, tk)
    grid_m = pl.cdiv(n, tm)
    grid_k = n_k_pad // tk
    vmem_limit = min(budget, max(32 << 20, _footprint(tm, tk, resident) + (4 << 20)))

    # ---- fold mask into weight once (tiny O(F_in*F_out) op) ----------------
    w_eff = weight if mask is None else weight * mask
    w_eff = w_eff.astype(cdt)

    # ---- support = X @ W_eff (rows zero-padded to the reduction granularity,
    #      cheap O(N*F_in); the O(N^2) adjacency is never copied/padded) ------
    x_c = x.astype(cdt)
    if n_k_pad != n:
        x_c = jnp.pad(x_c, ((0, n_k_pad - n), (0, 0)))
    ts = min(512, n_k_pad)
    support = pl.pallas_call(
        _support_kernel,
        out_shape=jax.ShapeDtypeStruct((n_k_pad, f_out), cdt),
        grid=(pl.cdiv(n_k_pad, ts),),
        in_specs=[
            pl.BlockSpec((ts, f_in), lambda i: (i, 0)),
            pl.BlockSpec((f_in, f_out), lambda i: (0, 0)),
        ],
        out_specs=pl.BlockSpec((ts, f_out), lambda i: (i, 0)),
        compiler_params=pltpu.CompilerParams(dimension_semantics=("parallel",)),
        cost_estimate=pl.CostEstimate(
            flops=2 * n_k_pad * f_in * f_out, transcendentals=0,
            bytes_accessed=c_isz * (n_k_pad * f_in + f_in * f_out
                                    + n_k_pad * f_out)),
    )(x_c, w_eff)

    # ---- out = adj @ support + bias, tiled & pipelined ----------------------
    b2d = (jnp.zeros((1, f_out), jnp.float32) if bias is None
           else bias.reshape(1, f_out).astype(jnp.float32))

    support_spec = (
        pl.BlockSpec((n_k_pad, f_out), lambda i, k: (0, 0)) if resident
        else pl.BlockSpec((tk, f_out), lambda i, k: (k, 0)))

    agg = partial(_aggregate_kernel, tk=tk, n_valid=n,
                  mask_cols=(n % tk != 0), support_resident=resident)

    out = pl.pallas_call(
        agg,
        out_shape=jax.ShapeDtypeStruct((n, f_out), out_dtype),
        grid=(grid_m, grid_k),
        in_specs=[
            pl.BlockSpec((tm, tk), lambda i, k: (i, k)),     # adj tile (native dtype)
            support_spec,                                    # support (resident/stream)
            pl.BlockSpec((1, f_out), lambda i, k: (0, 0)),   # bias
        ],
        out_specs=pl.BlockSpec((tm, f_out), lambda i, k: (i, 0)),
        scratch_shapes=([] if acc_in_out
                        else [pltpu.VMEM((tm, f_out), jnp.float32)]),
        compiler_params=pltpu.CompilerParams(
            dimension_semantics=("parallel", "arbitrary"),
            vmem_limit_bytes=int(vmem_limit)),
        cost_estimate=pl.CostEstimate(
            flops=2 * n * n_k_pad * f_out, transcendentals=0,
            bytes_accessed=adj_isz * n * n
                           + c_isz * n_k_pad * f_out * (1 if resident else grid_m)
                           + o_isz * n * f_out + 4 * f_out),
    )(adj, support, b2d)

    return out


if __name__ == "__main__":
    N, IN_FEATURES, OUT_FEATURES = 512, 64, 128

    key = jax.random.PRNGKey(0)
    k_x, k_adj, k_w, k_b, k_m = jax.random.split(key, 5)

    # Node features.
    x = jax.random.normal(k_x, (N, IN_FEATURES), dtype=jnp.float32)

    # Symmetric row-normalized adjacency (dense stand-in for torch.spmm input).
    a = (jax.random.uniform(k_adj, (N, N)) < 0.1).astype(jnp.float32)
    a = jnp.minimum(a + a.T + jnp.eye(N, dtype=jnp.float32), 1.0)
    adj = a / jnp.sum(a, axis=1, keepdims=True)

    # reset_parameters(): uniform(-stdv, stdv), stdv = 1/sqrt(out_features).
    stdv = 1.0 / math.sqrt(OUT_FEATURES)
    weight = jax.random.uniform(k_w, (IN_FEATURES, OUT_FEATURES),
                                minval=-stdv, maxval=stdv, dtype=jnp.float32)
    bias = jax.random.uniform(k_b, (OUT_FEATURES,),
                              minval=-stdv, maxval=stdv, dtype=jnp.float32)

    # Binary pruning mask (set_mask path, mask_flag=True behaviour).
    mask = (jax.random.uniform(k_m, (IN_FEATURES, OUT_FEATURES)) > 0.3
            ).astype(jnp.float32)

    hp = partial(jnp.matmul, precision=lax.Precision.HIGHEST)

    # 1) masked path, default f32 compute (PyTorch-equivalent numerics).
    ref_masked = hp(adj, hp(x, weight * mask)) + bias[None, :]
    out = jax.block_until_ready(
        masked_graph_convolution(x, adj, weight, bias=bias, mask=mask))
    assert out.shape == (N, OUT_FEATURES) and out.dtype == jnp.float32
    assert jnp.allclose(out, ref_masked, atol=1e-3, rtol=1e-3), \
        "masked f32 path mismatch vs reference"

    # 2) unmasked (mask_flag=False) path.
    ref_plain = hp(adj, hp(x, weight)) + bias[None, :]
    out_nom = jax.block_until_ready(
        masked_graph_convolution(x, adj, weight, bias=bias))
    assert jnp.allclose(out_nom, ref_plain, atol=1e-3, rtol=1e-3), \
        "unmasked path mismatch vs reference"

    # 3) bf16 opt-in compute path (support in bf16, adj tile cast in VMEM).
    out_bf16 = jax.block_until_ready(
        masked_graph_convolution(x, adj, weight, bias=bias, mask=mask,
                                 compute_dtype=jnp.bfloat16))
    assert jnp.allclose(out_bf16, ref_masked, atol=3e-2, rtol=3e-2), \
        "bf16 compute path mismatch vs reference"

    # 4) ragged N (not a tile multiple), no bias, bf16 inputs/output:
    #    exercises in-kernel column masking, partial blocks, and the scratch
    #    f32 accumulator path — without ever padding the adjacency.
    Nr = 500
    xr = x[:Nr].astype(jnp.bfloat16)
    adjr = adj[:Nr, :Nr]
    ref_r = hp(adjr, hp(xr.astype(jnp.float32), weight * mask))
    out_r = jax.block_until_ready(
        masked_graph_convolution(xr, adjr, weight, bias=None, mask=mask,
                                 compute_dtype=jnp.float32))
    assert out_r.shape == (Nr, OUT_FEATURES) and out_r.dtype == jnp.bfloat16
    assert jnp.allclose(out_r.astype(jnp.float32), ref_r, atol=3e-2, rtol=3e-2), \
        "ragged / bf16-output path mismatch vs reference"

    print("KERNEL_OK")
</pallas_src>

<mosaic_0001>
module attributes {stable_mosaic.version = 11 : i64} {
  func.func @_support_kernel(%arg0: i32, %arg1: memref<512x64xf32, #tpu.memory_space<vmem>>, %arg2: memref<64x128xf32, #tpu.memory_space<vmem>>, %arg3: memref<512x128xf32, #tpu.memory_space<vmem>>) attributes {dimension_semantics = [#tpu.dimension_semantics<parallel>], iteration_bounds = array<i64: 1>, scalar_prefetch = 0 : i64, scratch_operands = 0 : i64, tpu.core_type = #tpu.core_type<tc>, window_params = [{transform_indices = @transform_0, window_bounds = array<i64: 512, 64>}, {pipeline_mode = #tpu.pipeline_mode<synchronous>, transform_indices = @transform_1, window_bounds = array<i64: 64, 128>}, {transform_indices = @transform_2, window_bounds = array<i64: 512, 128>}]} {
    %c0 = arith.constant 0 : index
    %c0_0 = arith.constant 0 : index
    %0 = vector.load %arg1[%c0, %c0_0] : memref<512x64xf32, #tpu.memory_space<vmem>>, vector<512x64xf32>
    %c0_1 = arith.constant 0 : index
    %c0_2 = arith.constant 0 : index
    %1 = vector.load %arg2[%c0_1, %c0_2] : memref<64x128xf32, #tpu.memory_space<vmem>>, vector<64x128xf32>
    %cst = arith.constant dense<0.000000e+00> : vector<512x128xf32>
    %2 = tpu.matmul %0, %1, %cst {dimension_numbers = #tpu.dot_dimension_numbers<[1], [0], [0], [1], [0, 0, 1, 1], [], []>} : vector<512x64xf32>, vector<64x128xf32>, vector<512x128xf32> -> vector<512x128xf32>
    %c0_3 = arith.constant 0 : index
    %c0_4 = arith.constant 0 : index
    %3 = vector.load %arg3[%c0_3, %c0_4] : memref<512x128xf32, #tpu.memory_space<vmem>>, vector<512x128xf32>
    tpu.vector_store %arg3[%c0_3, %c0_4], %2 {strides = array<i32>} : memref<512x128xf32, #tpu.memory_space<vmem>>, vector<512x128xf32>,
    return
  }
  func.func @transform_0(%arg0: i32) -> (i32, i32) {
    %c0_i32 = arith.constant 0 : i32
    %c0_i32_0 = arith.constant 0 : i32
    return %arg0, %c0_i32 : i32, i32
  }
  func.func @transform_1(%arg0: i32) -> (i32, i32) {
    %c0_i32 = arith.constant 0 : i32
    %c0_i32_0 = arith.constant 0 : i32
    %c0_i32_1 = arith.constant 0 : i32
    return %c0_i32, %c0_i32_0 : i32, i32
  }
  func.func @transform_2(%arg0: i32) -> (i32, i32) {
    %c0_i32 = arith.constant 0 : i32
    %c0_i32_0 = arith.constant 0 : i32
    return %arg0, %c0_i32 : i32, i32
  }
}

</mosaic_0001>

<llo_original>
// kernel: tpu_custom_call.1
$region0: #{tpu_custom_call.1}
  #allocation0 [shape = 'u32[]', space=smem, size = 0x4, offset = 0x4, fixed_abs, tag = 'smem constant byte address 0x4 - core index']
  #allocation1 [shape = 'u32[144,128]{1,0:T(1,128)}', space=vmem, size = 0x12000, scoped, tag = 'internal scratch']
  %s0 = inlined_call_operand.vmem [shape: f32[512,64], index: 0, kind: input, shape index: {}]
  %s1 = inlined_call_operand.vmem [shape: f32[64,128], index: 1, kind: input, shape index: {}]
  %s2 = inlined_call_operand.hbm [shape: f32[512,128], index: 2, kind: output, shape index: {}]
  %s3 = sld [smem:[#allocation0]]
  $region18: #{tpu_custom_call.1} parent=0
    _
  %s5 = ssub.s32 1, %s3
  %s6 = scalar_select 0, %s5, %s3
  $region1: #{tpu_custom_call.1} parent=0
    #allocation2 [shape = 'u8[262144]{0}', space=vmem, size = 0x40000, scoped, tag = 'output window, operand 0, single buffered']
    #allocation3 [shape = 's32[1]{0}', space=sflag, size = 0x4, scoped, tag = 'scoped memory for tpu_custom_call.1']
    %7 = vsyncpa [#allocation3], 0
    // Predicated region
    $region2: #{tpu_custom_call.1} parent=1 // pred_check
      _
    $region3: #{tpu_custom_call.1} parent=1 // pred_check_branch
      %9 = sbr.rel (0) target = $region5
    $region4: #{tpu_custom_call.1} parent=1 // pred_region
      _
    $region5: #{tpu_custom_call.1} parent=1 // pred_fallthru
      _
    // Predicated region
    $region6: #{tpu_custom_call.1} parent=1 // pred_check
      _
    $region7: #{tpu_custom_call.1} parent=1 // pred_check_branch
      %11 = sbr.rel (0) target = $region9
    $region8: #{tpu_custom_call.1} parent=1 // pred_region
      _
    $region9: #{tpu_custom_call.1} parent=1 // pred_fallthru
      _
    %v12 = vld [vmem:[%s0] sm:$0xff]
    %v13 = vld [vmem:[%s0 + $0x8] sm:$0xff]
    %v14 = vld [vmem:[%s0 + $0x10] sm:$0xff]
    %v15 = vld [vmem:[%s0 + $0x18] sm:$0xff]
    %v16 = vld [vmem:[%s0 + $0x20] sm:$0xff]
    %v17 = vld [vmem:[%s0 + $0x28] sm:$0xff]
    %v18 = vld [vmem:[%s0 + $0x30] sm:$0xff]
    %v19 = vld [vmem:[%s0 + $0x38] sm:$0xff]
    %v20 = vld [vmem:[%s0 + $0x40] sm:$0xff]
    %v21 = vld [vmem:[%s0 + $0x48] sm:$0xff]
    %v22 = vld [vmem:[%s0 + $0x50] sm:$0xff]
    %v23 = vld [vmem:[%s0 + $0x58] sm:$0xff]
    %v24 = vld [vmem:[%s0 + $0x60] sm:$0xff]
    %v25 = vld [vmem:[%s0 + $0x68] sm:$0xff]
    %v26 = vld [vmem:[%s0 + $0x70] sm:$0xff]
    %v27 = vld [vmem:[%s0 + $0x78] sm:$0xff]
    %v28 = vld [vmem:[%s0 + $0x80] sm:$0xff]
    %v29 = vld [vmem:[%s0 + $0x88] sm:$0xff]
    %v30 = vld [vmem:[%s0 + $0x90] sm:$0xff]
    %v31 = vld [vmem:[%s0 + $0x98] sm:$0xff]
    %v32 = vld [vmem:[%s0 + $0xa0] sm:$0xff]
    %v33 = vld [vmem:[%s0 + $0xa8] sm:$0xff]
    %v34 = vld [vmem:[%s0 + $0xb0] sm:$0xff]
    %v35 = vld [vmem:[%s0 + $0xb8] sm:$0xff]
    %v36 = vld [vmem:[%s0 + $0xc0] sm:$0xff]
    %v37 = vld [vmem:[%s0 + $0xc8] sm:$0xff]
    %v38 = vld [vmem:[%s0 + $0xd0] sm:$0xff]
    %v39 = vld [vmem:[%s0 + $0xd8] sm:$0xff]
    %v40 = vld [vmem:[%s0 + $0xe0] sm:$0xff]
    %v41 = vld [vmem:[%s0 + $0xe8] sm:$0xff]
    %v42 = vld [vmem:[%s0 + $0xf0] sm:$0xff]
    %v43 = vld [vmem:[%s0 + $0xf8] sm:$0xff]
    %v44 = vld [vmem:[%s0 + $0x100] sm:$0xff]
    %v45 = vld [vmem:[%s0 + $0x108] sm:$0xff]
    %v46 = vld [vmem:[%s0 + $0x110] sm:$0xff]
    %v47 = vld [vmem:[%s0 + $0x118] sm:$0xff]
    %v48 = vld [vmem:[%s0 + $0x120] sm:$0xff]
    %v49 = vld [vmem:[%s0 + $0x128] sm:$0xff]
    %v50 = vld [vmem:[%s0 + $0x130] sm:$0xff]
    %v51 = vld [vmem:[%s0 + $0x138] sm:$0xff]
    %v52 = vld [vmem:[%s0 + $0x140] sm:$0xff]
    %v53 = vld [vmem:[%s0 + $0x148] sm:$0xff]
    %v54 = vld [vmem:[%s0 + $0x150] sm:$0xff]
    %v55 = vld [vmem:[%s0 + $0x158] sm:$0xff]
    %v56 = vld [vmem:[%s0 + $0x160] sm:$0xff]
    %v57 = vld [vmem:[%s0 + $0x168] sm:$0xff]
    %v58 = vld [vmem:[%s0 + $0x170] sm:$0xff]
    %v59 = vld [vmem:[%s0 + $0x178] sm:$0xff]
    %v60 = vld [vmem:[%s0 + $0x180] sm:$0xff]
    %v61 = vld [vmem:[%s0 + $0x188] sm:$0xff]
    %v62 = vld [vmem:[%s0 + $0x190] sm:$0xff]
    %v63 = vld [vmem:[%s0 + $0x198] sm:$0xff]
    %v64 = vld [vmem:[%s0 + $0x1a0] sm:$0xff]
    %v65 = vld [vmem:[%s0 + $0x1a8] sm:$0xff]
    %v66 = vld [vmem:[%s0 + $0x1b0] sm:$0xff]
    %v67 = vld [vmem:[%s0 + $0x1b8] sm:$0xff]
    %v68 = vld [vmem:[%s0 + $0x1c0] sm:$0xff]
    %v69 = vld [vmem:[%s0 + $0x1c8] sm:$0xff]
    %v70 = vld [vmem:[%s0 + $0x1d0] sm:$0xff]
    %v71 = vld [vmem:[%s0 + $0x1d8] sm:$0xff]
    %v72 = vld [vmem:[%s0 + $0x1e0] sm:$0xff]
    %v73 = vld [vmem:[%s0 + $0x1e8] sm:$0xff]
    %v74 = vld [vmem:[%s0 + $0x1f0] sm:$0xff]
    %v75 = vld [vmem:[%s0 + $0x1f8] sm:$0xff]
    %v76 = vld [vmem:[%s1] sm:$0xff]
    %v77 = vld [vmem:[%s1 + $0x8] sm:$0xff]
    %v78 = vld [vmem:[%s1 + $0x10] sm:$0xff]
    %v79 = vld [vmem:[%s1 + $0x18] sm:$0xff]
    %v80 = vld [vmem:[%s1 + $0x20] sm:$0xff]
    %v81 = vld [vmem:[%s1 + $0x28] sm:$0xff]
    %v82 = vld [vmem:[%s1 + $0x30] sm:$0xff]
    %v83 = vld [vmem:[%s1 + $0x38] sm:$0xff]
    %vm84 = vcmask 523264
    %v86 = vsel %vm84, %v12, 0
    %v89 = vsel %vm84, %v13, 0
    %v92 = vsel %vm84, %v14, 0
    %v95 = vsel %vm84, %v15, 0
    %v98 = vsel %vm84, %v16, 0
    %v101 = vsel %vm84, %v17, 0
    %v104 = vsel %vm84, %v18, 0
    %v107 = vsel %vm84, %v19, 0
    %v110 = vsel %vm84, %v20, 0
    %v113 = vsel %vm84, %v21, 0
    %v116 = vsel %vm84, %v22, 0
    %v119 = vsel %vm84, %v23, 0
    %v122 = vsel %vm84, %v24, 0
    %v125 = vsel %vm84, %v25, 0
    %v128 = vsel %vm84, %v26, 0
    %v131 = vsel %vm84, %v27, 0
    %v134 = vsel %vm84, %v28, 0
    %v137 = vsel %vm84, %v29, 0
    %v140 = vsel %vm84, %v30, 0
    %v143 = vsel %vm84, %v31, 0
    %v146 = vsel %vm84, %v32, 0
    %v149 = vsel %vm84, %v33, 0
    %v152 = vsel %vm84, %v34, 0
    %v155 = vsel %vm84, %v35, 0
    %v158 = vsel %vm84, %v36, 0
    %v161 = vsel %vm84, %v37, 0
    %v164 = vsel %vm84, %v38, 0
    %v167 = vsel %vm84, %v39, 0
    %v170 = vsel %vm84, %v40, 0
    %v173 = vsel %vm84, %v41, 0
    %v176 = vsel %vm84, %v42, 0
    %v179 = vsel %vm84, %v43, 0
    %v182 = vsel %vm84, %v44, 0
    %v185 = vsel %vm84, %v45, 0
    %v188 = vsel %vm84, %v46, 0
    %v191 = vsel %vm84, %v47, 0
    %v194 = vsel %vm84, %v48, 0
    %v197 = vsel %vm84, %v49, 0
    %v200 = vsel %vm84, %v50, 0
    %v203 = vsel %vm84, %v51, 0
    %v206 = vsel %vm84, %v52, 0
    %v209 = vsel %vm84, %v53, 0
    %v212 = vsel %vm84, %v54, 0
    %v215 = vsel %vm84, %v55, 0
    %v218 = vsel %vm84, %v56, 0
    %v221 = vsel %vm84, %v57, 0
    %v224 = vsel %vm84, %v58, 0
    %v227 = vsel %vm84, %v59, 0
    %v230 = vsel %vm84, %v60, 0
    %v233 = vsel %vm84, %v61, 0
    %v236 = vsel %vm84, %v62, 0
    %v239 = vsel %vm84, %v63, 0
    %v242 = vsel %vm84, %v64, 0
    %v245 = vsel %vm84, %v65, 0
    %v248 = vsel %vm84, %v66, 0
    %v251 = vsel %vm84, %v67, 0
    %v254 = vsel %vm84, %v68, 0
    %v257 = vsel %vm84, %v69, 0
    %v260 = vsel %vm84, %v70, 0
    %v263 = vsel %vm84, %v71, 0
    %v266 = vsel %vm84, %v72, 0
    %v269 = vsel %vm84, %v73, 0
    %v272 = vsel %vm84, %v74, 0
    %v275 = vsel %vm84, %v75, 0
    %277 = vmatprep.subr.mxu0 0.0
    %278 = vmatpush1.msra.mxu0 %v76
    %279 = vmatprep.subr.mxu0 0.0
    %280 = vmatpush1.msra.mxu0 %v77
    %281 = vmatprep.subr.mxu0 0.0
    %282 = vmatpush1.msra.mxu0 %v78
    %283 = vmatprep.subr.mxu0 0.0
    %284 = vmatpush1.msra.mxu0 %v79
    %285 = vmatprep.subr.mxu0 0.0
    %286 = vmatpush1.msra.mxu0 %v80
    %287 = vmatprep.subr.mxu0 0.0
    %288 = vmatpush1.msra.mxu0 %v81
    %289 = vmatprep.subr.mxu0 0.0
    %290 = vmatpush1.msra.mxu0 %v82
    %291 = vmatprep.subr.mxu0 0.0
    %292 = vmatpush1.msra.mxu0 %v83
    %293 = vmatprep.subr.mxu0 0.0
    %294 = vmatpush1.msra.mxu0 0.0
    %295 = vmatprep.subr.mxu0 0.0
    %296 = vmatpush1.msra.mxu0 0.0
    %297 = vmatprep.subr.mxu0 0.0
    %298 = vmatpush1.msra.mxu0 0.0
    %299 = vmatprep.subr.mxu0 0.0
    %300 = vmatpush1.msra.mxu0 0.0
    %301 = vmatprep.subr.mxu0 0.0
    %302 = vmatpush1.msra.mxu0 0.0
    %303 = vmatprep.subr.mxu0 0.0
    %304 = vmatpush1.msra.mxu0 0.0
    %305 = vmatprep.subr.mxu0 0.0
    %306 = vmatpush1.msra.mxu0 0.0
    %307 = vmatprep.subr.mxu0 0.0
    %308 = vmatpush1.msra.mxu0 0.0
    %309 = vmatprep.subr.mxu0 0.0
    %310 = vmatpush1.msra.mxu0 0.0
    %311 = vmatprep.subr.mxu0 0.0
    %312 = vmatpush1.msra.mxu0 0.0
    %313 = vmatprep.subr.mxu0 0.0
    %314 = vmatpush1.msra.mxu0 0.0
    %315 = vmatprep.subr.mxu0 0.0
    %316 = vmatpush1.msra.mxu0 0.0
    %317 = vmatprep.subr.mxu0 0.0
    %318 = vmatpush1.msra.mxu0 0.0
    %319 = vmatprep.subr.mxu0 0.0
    %320 = vmatpush1.msra.mxu0 0.0
    %321 = vmatprep.subr.mxu0 0.0
    %322 = vmatpush1.msra.mxu0 0.0
    %323 = vmatprep.subr.mxu0 0.0
    %324 = vmatpush1.msra.mxu0 0.0
    %325 = vmatprep.subr.mxu0 0.0
    %326 = vmatpush1.msra.mxu0 0.0
    %327 = vmatprep.subr.mxu0 0.0
    %328 = vmatpush1.msra.mxu0 0.0
    %329 = vmatprep.subr.mxu0 0.0
    %330 = vmatpush1.msra.mxu0 0.0
    %331 = vmatprep.subr.mxu0 0.0
    %332 = vmatpush1.msra.mxu0 0.0
    %333 = vmatprep.subr.mxu0 0.0
    %334 = vmatpush1.msra.mxu0 0.0
    %335 = vmatprep.subr.mxu0 0.0
    %336 = vmatpush1.msra.mxu0 0.0
    %337 = vmatprep.subr.mxu0 0.0
    %338 = vmatpush1.msra.mxu0 0.0
    %339 = vmatprep.subr.mxu0 0.0
    %340 = vmatpush1.msra.mxu0 0.0
    %341 = vmatprep.mubr.f32.mxu0 0.0
    %342 = vmatmul.mubr.f32.gmra.mrb[0].mxu0 %v86
    %v343 = vpop.f32.mrb[0].mxu0
    %v344 = vadd.f32 0.0, %v343
    %v345 = vpop.f32.mrb[0].mxu0
    %346 = vmatprep.mubr.f32.mxu0 0.0
    %347 = vmatmul.mubr.f32.gmra.mrb[0].mxu0 %v89
    %v348 = vpop.f32.mrb[0].mxu0
    %v349 = vadd.f32 0.0, %v348
    %v350 = vpop.f32.mrb[0].mxu0
    %351 = vmatprep.mubr.f32.mxu0 0.0
    %352 = vmatmul.mubr.f32.gmra.mrb[0].mxu0 %v92
    %v353 = vpop.f32.mrb[0].mxu0
    %v354 = vadd.f32 0.0, %v353
    %v355 = vpop.f32.mrb[0].mxu0
    %356 = vmatprep.mubr.f32.mxu0 0.0
    %357 = vmatmul.mubr.f32.gmra.mrb[0].mxu0 %v95
    %v358 = vpop.f32.mrb[0].mxu0
    %v359 = vadd.f32 0.0, %v358
    %v360 = vpop.f32.mrb[0].mxu0
    %361 = vmatprep.mubr.f32.mxu0 0.0
    %362 = vmatmul.mubr.f32.gmra.mrb[0].mxu0 %v98
    %v363 = vpop.f32.mrb[0].mxu0
    %v364 = vadd.f32 0.0, %v363
    %v365 = vpop.f32.mrb[0].mxu0
    %366 = vmatprep.mubr.f32.mxu0 0.0
    %367 = vmatmul.mubr.f32.gmra.mrb[0].mxu0 %v101
    %v368 = vpop.f32.mrb[0].mxu0
    %v369 = vadd.f32 0.0, %v368
    %v370 = vpop.f32.mrb[0].mxu0
    %371 = vmatprep.mubr.f32.mxu0 0.0
    %372 = vmatmul.mubr.f32.gmra.mrb[0].mxu0 %v104
    %v373 = vpop.f32.mrb[0].mxu0
    %v374 = vadd.f32 0.0, %v373
    %v375 = vpop.f32.mrb[0].mxu0
    %376 = vmatprep.mubr.f32.mxu0 0.0
    %377 = vmatmul.mubr.f32.gmra.mrb[0].mxu0 %v107
    %v378 = vpop.f32.mrb[0].mxu0
    %v379 = vadd.f32 0.0, %v378
    %v380 = vpop.f32.mrb[0].mxu0
    %381 = vmatprep.mubr.f32.mxu0 0.0
    %382 = vmatmul.mubr.f32.gmra.mrb[0].mxu0 %v110
    %v383 = vpop.f32.mrb[0].mxu0
    %v384 = vadd.f32 0.0, %v383
    %v385 = vpop.f32.mrb[0].mxu0
    %386 = vmatprep.mubr.f32.mxu0 0.0
    %387 = vmatmul.mubr.f32.gmra.mrb[0].mxu0 %v113
    %v388 = vpop.f32.mrb[0].mxu0
    %v389 = vadd.f32 0.0, %v388
    %v390 = vpop.f32.mrb[0].mxu0
    %391 = vmatprep.mubr.f32.mxu0 0.0
    %392 = vmatmul.mubr.f32.gmra.mrb[0].mxu0 %v116
    %v393 = vpop.f32.mrb[0].mxu0
    %v394 = vadd.f32 0.0, %v393
    %v395 = vpop.f32.mrb[0].mxu0
    %396 = vmatprep.mubr.f32.mxu0 0.0
    %397 = vmatmul.mubr.f32.gmra.mrb[0].mxu0 %v119
    %v398 = vpop.f32.mrb[0].mxu0
    %v399 = vadd.f32 0.0, %v398
    %v400 = vpop.f32.mrb[0].mxu0
    %401 = vmatprep.mubr.f32.mxu0 0.0
    %402 = vmatmul.mubr.f32.gmra.mrb[0].mxu0 %v122
    %v403 = vpop.f32.mrb[0].mxu0
    %v404 = vadd.f32 0.0, %v403
    %v405 = vpop.f32.mrb[0].mxu0
    %406 = vmatprep.mubr.f32.mxu0 0.0
    %407 = vmatmul.mubr.f32.gmra.mrb[0].mxu0 %v125
    %v408 = vpop.f32.mrb[0].mxu0
    %v409 = vadd.f32 0.0, %v408
    %v410 = vpop.f32.mrb[0].mxu0
    %411 = vmatprep.mubr.f32.mxu0 0.0
    %412 = vmatmul.mubr.f32.gmra.mrb[0].mxu0 %v128
    %v413 = vpop.f32.mrb[0].mxu0
    %v414 = vadd.f32 0.0, %v413
    %v415 = vpop.f32.mrb[0].mxu0
    %416 = vmatprep.mubr.f32.mxu0 0.0
    %417 = vmatmul.mubr.f32.gmra.mrb[0].mxu0 %v131
    %v418 = vpop.f32.mrb[0].mxu0
    %v419 = vadd.f32 0.0, %v418
    %v420 = vpop.f32.mrb[0].mxu0
    %421 = vmatprep.mubr.f32.mxu0 0.0
    %422 = vmatmul.mubr.f32.gmra.mrb[0].mxu0 %v134
    %v423 = vpop.f32.mrb[0].mxu0
    %v424 = vadd.f32 0.0, %v423
    %v425 = vpop.f32.mrb[0].mxu0
    %426 = vmatprep.mubr.f32.mxu0 0.0
    %427 = vmatmul.mubr.f32.gmra.mrb[0].mxu0 %v137
    %v428 = vpop.f32.mrb[0].mxu0
    %v429 = vadd.f32 0.0, %v428
    %v430 = vpop.f32.mrb[0].mxu0
    %431 = vmatprep.mubr.f32.mxu0 0.0
    %432 = vmatmul.mubr.f32.gmra.mrb[0].mxu0 %v140
    %v433 = vpop.f32.mrb[0].mxu0
    %v434 = vadd.f32 0.0, %v433
    %v435 = vpop.f32.mrb[0].mxu0
    %436 = vmatprep.mubr.f32.mxu0 0.0
    %437 = vmatmul.mubr.f32.gmra.mrb[0].mxu0 %v143
    %v438 = vpop.f32.mrb[0].mxu0
    %v439 = vadd.f32 0.0, %v438
    %v440 = vpop.f32.mrb[0].mxu0
    %441 = vmatprep.mubr.f32.mxu0 0.0
    %442 = vmatmul.mubr.f32.gmra.mrb[0].mxu0 %v146
    %v443 = vpop.f32.mrb[0].mxu0
    %v444 = vadd.f32 0.0, %v443
    %v445 = vpop.f32.mrb[0].mxu0
    %446 = vmatprep.mubr.f32.mxu0 0.0
    %447 = vmatmul.mubr.f32.gmra.mrb[0].mxu0 %v149
    %v448 = vpop.f32.mrb[0].mxu0
    %v449 = vadd.f32 0.0, %v448
    %v450 = vpop.f32.mrb[0].mxu0
    %451 = vmatprep.mubr.f32.mxu0 0.0
    %452 = vmatmul.mubr.f32.gmra.mrb[0].mxu0 %v152
    %v453 = vpop.f32.mrb[0].mxu0
    %v454 = vadd.f32 0.0, %v453
    %v455 = vpop.f32.mrb[0].mxu0
    %456 = vmatprep.mubr.f32.mxu0 0.0
    %457 = vmatmul.mubr.f32.gmra.mrb[0].mxu0 %v155
    %v458 = vpop.f32.mrb[0].mxu0
    %v459 = vadd.f32 0.0, %v458
    %v460 = vpop.f32.mrb[0].mxu0
    %461 = vmatprep.mubr.f32.mxu0 0.0
    %462 = vmatmul.mubr.f32.gmra.mrb[0].mxu0 %v158
    %v463 = vpop.f32.mrb[0].mxu0
    %v464 = vadd.f32 0.0, %v463
    %v465 = vpop.f32.mrb[0].mxu0
    %466 = vmatprep.mubr.f32.mxu0 0.0
    %467 = vmatmul.mubr.f32.gmra.mrb[0].mxu0 %v161
    %v468 = vpop.f32.mrb[0].mxu0
    %v469 = vadd.f32 0.0, %v468
    %v470 = vpop.f32.mrb[0].mxu0
    %471 = vmatprep.mubr.f32.mxu0 0.0
    %472 = vmatmul.mubr.f32.gmra.mrb[0].mxu0 %v164
    %v473 = vpop.f32.mrb[0].mxu0
    %v474 = vadd.f32 0.0, %v473
    %v475 = vpop.f32.mrb[0].mxu0
    %476 = vmatprep.mubr.f32.mxu0 0.0
    %477 = vmatmul.mubr.f32.gmra.mrb[0].mxu0 %v167
    %v478 = vpop.f32.mrb[0].mxu0
    %v479 = vadd.f32 0.0, %v478
    %v480 = vpop.f32.mrb[0].mxu0
    %481 = vmatprep.mubr.f32.mxu0 0.0
    %482 = vmatmul.mubr.f32.gmra.mrb[0].mxu0 %v170
    %v483 = vpop.f32.mrb[0].mxu0
    %v484 = vadd.f32 0.0, %v483
    %v485 = vpop.f32.mrb[0].mxu0
    %486 = vmatprep.mubr.f32.mxu0 0.0
    %487 = vmatmul.mubr.f32.gmra.mrb[0].mxu0 %v173
    %v488 = vpop.f32.mrb[0].mxu0
    %v489 = vadd.f32 0.0, %v488
    %v490 = vpop.f32.mrb[0].mxu0
    %491 = vmatprep.mubr.f32.mxu0 0.0
    %492 = vmatmul.mubr.f32.gmra.mrb[0].mxu0 %v176
    %v493 = vpop.f32.mrb[0].mxu0
    %v494 = vadd.f32 0.0, %v493
    %v495 = vpop.f32.mrb[0].mxu0
    %496 = vmatprep.mubr.f32.mxu0 0.0
    %497 = vmatmul.mubr.f32.gmra.mrb[0].mxu0 %v179
    %v498 = vpop.f32.mrb[0].mxu0
    %v499 = vadd.f32 0.0, %v498
    %v500 = vpop.f32.mrb[0].mxu0
    %501 = vmatprep.mubr.f32.mxu0 0.0
    %502 = vmatmul.mubr.f32.gmra.mrb[0].mxu0 %v182
    %v503 = vpop.f32.mrb[0].mxu0
    %v504 = vadd.f32 0.0, %v503
    %v505 = vpop.f32.mrb[0].mxu0
    %506 = vmatprep.mubr.f32.mxu0 0.0
    %507 = vmatmul.mubr.f32.gmra.mrb[0].mxu0 %v185
    %v508 = vpop.f32.mrb[0].mxu0
    %v509 = vadd.f32 0.0, %v508
    %v510 = vpop.f32.mrb[0].mxu0
    %511 = vmatprep.mubr.f32.mxu0 0.0
    %512 = vmatmul.mubr.f32.gmra.mrb[0].mxu0 %v188
    %v513 = vpop.f32.mrb[0].mxu0
    %v514 = vadd.f32 0.0, %v513
    %v515 = vpop.f32.mrb[0].mxu0
    %516 = vmatprep.mubr.f32.mxu0 0.0
    %517 = vmatmul.mubr.f32.gmra.mrb[0].mxu0 %v191
    %v518 = vpop.f32.mrb[0].mxu0
    %v519 = vadd.f32 0.0, %v518
    %v520 = vpop.f32.mrb[0].mxu0
    %521 = vmatprep.mubr.f32.mxu0 0.0
    %522 = vmatmul.mubr.f32.gmra.mrb[0].mxu0 %v194
    %v523 = vpop.f32.mrb[0].mxu0
    %v524 = vadd.f32 0.0, %v523
    %v525 = vpop.f32.mrb[0].mxu0
    %526 = vmatprep.mubr.f32.mxu0 0.0
    %527 = vmatmul.mubr.f32.gmra.mrb[0].mxu0 %v197
    %v528 = vpop.f32.mrb[0].mxu0
    %v529 = vadd.f32 0.0, %v528
    %v530 = vpop.f32.mrb[0].mxu0
    %531 = vmatprep.mubr.f32.mxu0 0.0
    %532 = vmatmul.mubr.f32.gmra.mrb[0].mxu0 %v200
    %v533 = vpop.f32.mrb[0].mxu0
    %v534 = vadd.f32 0.0, %v533
    %v535 = vpop.f32.mrb[0].mxu0
    %536 = vmatprep.mubr.f32.mxu0 0.0
    %537 = vmatmul.mubr.f32.gmra.mrb[0].mxu0 %v203
    %v538 = vpop.f32.mrb[0].mxu0
    %v539 = vadd.f32 0.0, %v538
    %v540 = vpop.f32.mrb[0].mxu0
    %541 = vmatprep.mubr.f32.mxu0 0.0
    %542 = vmatmul.mubr.f32.gmra.mrb[0].mxu0 %v206
    %v543 = vpop.f32.mrb[0].mxu0
    %v544 = vadd.f32 0.0, %v543
    %v545 = vpop.f32.mrb[0].mxu0
    %546 = vmatprep.mubr.f32.mxu0 0.0
    %547 = vmatmul.mubr.f32.gmra.mrb[0].mxu0 %v209
    %v548 = vpop.f32.mrb[0].mxu0
    %v549 = vadd.f32 0.0, %v548
    %v550 = vpop.f32.mrb[0].mxu0
    %551 = vmatprep.mubr.f32.mxu0 0.0
    %552 = vmatmul.mubr.f32.gmra.mrb[0].mxu0 %v212
    %v553 = vpop.f32.mrb[0].mxu0
    %v554 = vadd.f32 0.0, %v553
    %v555 = vpop.f32.mrb[0].mxu0
    %556 = vmatprep.mubr.f32.mxu0 0.0
    %557 = vmatmul.mubr.f32.gmra.mrb[0].mxu0 %v215
    %v558 = vpop.f32.mrb[0].mxu0
    %v559 = vadd.f32 0.0, %v558
    %v560 = vpop.f32.mrb[0].mxu0
    %561 = vmatprep.mubr.f32.mxu0 0.0
    %562 = vmatmul.mubr.f32.gmra.mrb[0].mxu0 %v218
    %v563 = vpop.f32.mrb[0].mxu0
    %v564 = vadd.f32 0.0, %v563
    %v565 = vpop.f32.mrb[0].mxu0
    %566 = vmatprep.mubr.f32.mxu0 0.0
    %567 = vmatmul.mubr.f32.gmra.mrb[0].mxu0 %v221
    %v568 = vpop.f32.mrb[0].mxu0
    %v569 = vadd.f32 0.0, %v568
    %v570 = vpop.f32.mrb[0].mxu0
    %571 = vmatprep.mubr.f32.mxu0 0.0
    %572 = vmatmul.mubr.f32.gmra.mrb[0].mxu0 %v224
    %v573 = vpop.f32.mrb[0].mxu0
    %v574 = vadd.f32 0.0, %v573
    %v575 = vpop.f32.mrb[0].mxu0
    %576 = vmatprep.mubr.f32.mxu0 0.0
    %577 = vmatmul.mubr.f32.gmra.mrb[0].mxu0 %v227
    %v578 = vpop.f32.mrb[0].mxu0
    %v579 = vadd.f32 0.0, %v578
    %v580 = vpop.f32.mrb[0].mxu0
    %581 = vmatprep.mubr.f32.mxu0 0.0
    %582 = vmatmul.mubr.f32.gmra.mrb[0].mxu0 %v230
    %v583 = vpop.f32.mrb[0].mxu0
    %v584 = vadd.f32 0.0, %v583
    %v585 = vpop.f32.mrb[0].mxu0
    %586 = vmatprep.mubr.f32.mxu0 0.0
    %587 = vmatmul.mubr.f32.gmra.mrb[0].mxu0 %v233
    %v588 = vpop.f32.mrb[0].mxu0
    %v589 = vadd.f32 0.0, %v588
    %v590 = vpop.f32.mrb[0].mxu0
    %591 = vmatprep.mubr.f32.mxu0 0.0
    %592 = vmatmul.mubr.f32.gmra.mrb[0].mxu0 %v236
    %v593 = vpop.f32.mrb[0].mxu0
    %v594 = vadd.f32 0.0, %v593
    %v595 = vpop.f32.mrb[0].mxu0
    %596 = vmatprep.mubr.f32.mxu0 0.0
    %597 = vmatmul.mubr.f32.gmra.mrb[0].mxu0 %v239
    %v598 = vpop.f32.mrb[0].mxu0
    %v599 = vadd.f32 0.0, %v598
    %v600 = vpop.f32.mrb[0].mxu0
    %601 = vmatprep.mubr.f32.mxu0 0.0
    %602 = vmatmul.mubr.f32.gmra.mrb[0].mxu0 %v242
    %v603 = vpop.f32.mrb[0].mxu0
    %v604 = vadd.f32 0.0, %v603
    %v605 = vpop.f32.mrb[0].mxu0
    %606 = vmatprep.mubr.f32.mxu0 0.0
    %607 = vmatmul.mubr.f32.gmra.mrb[0].mxu0 %v245
    %v608 = vpop.f32.mrb[0].mxu0
    %v609 = vadd.f32 0.0, %v608
    %v610 = vpop.f32.mrb[0].mxu0
    %611 = vmatprep.mubr.f32.mxu0 0.0
    %612 = vmatmul.mubr.f32.gmra.mrb[0].mxu0 %v248
    %v613 = vpop.f32.mrb[0].mxu0
    %v614 = vadd.f32 0.0, %v613
    %v615 = vpop.f32.mrb[0].mxu0
    %616 = vmatprep.mubr.f32.mxu0 0.0
    %617 = vmatmul.mubr.f32.gmra.mrb[0].mxu0 %v251
    %v618 = vpop.f32.mrb[0].mxu0
    %v619 = vadd.f32 0.0, %v618
    %v620 = vpop.f32.mrb[0].mxu0
    %621 = vmatprep.mubr.f32.mxu0 0.0
    %622 = vmatmul.mubr.f32.gmra.mrb[0].mxu0 %v254
    %v623 = vpop.f32.mrb[0].mxu0
    %v624 = vadd.f32 0.0, %v623
    %v625 = vpop.f32.mrb[0].mxu0
    %626 = vmatprep.mubr.f32.mxu0 0.0
    %627 = vmatmul.mubr.f32.gmra.mrb[0].mxu0 %v257
    %v628 = vpop.f32.mrb[0].mxu0
    %v629 = vadd.f32 0.0, %v628
    %v630 = vpop.f32.mrb[0].mxu0
    %631 = vmatprep.mubr.f32.mxu0 0.0
    %632 = vmatmul.mubr.f32.gmra.mrb[0].mxu0 %v260
    %v633 = vpop.f32.mrb[0].mxu0
    %v634 = vadd.f32 0.0, %v633
    %v635 = vpop.f32.mrb[0].mxu0
    %636 = vmatprep.mubr.f32.mxu0 0.0
    %637 = vmatmul.mubr.f32.gmra.mrb[0].mxu0 %v263
    %v638 = vpop.f32.mrb[0].mxu0
    %v639 = vadd.f32 0.0, %v638
    %v640 = vpop.f32.mrb[0].mxu0
    %641 = vmatprep.mubr.f32.mxu0 0.0
    %642 = vmatmul.mubr.f32.gmra.mrb[0].mxu0 %v266
    %v643 = vpop.f32.mrb[0].mxu0
    %v644 = vadd.f32 0.0, %v643
    %v645 = vpop.f32.mrb[0].mxu0
    %646 = vmatprep.mubr.f32.mxu0 0.0
    %647 = vmatmul.mubr.f32.gmra.mrb[0].mxu0 %v269
    %v648 = vpop.f32.mrb[0].mxu0
    %v649 = vadd.f32 0.0, %v648
    %v650 = vpop.f32.mrb[0].mxu0
    %651 = vmatprep.mubr.f32.mxu0 0.0
    %652 = vmatmul.mubr.f32.gmra.mrb[0].mxu0 %v272
    %v653 = vpop.f32.mrb[0].mxu0
    %v654 = vadd.f32 0.0, %v653
    %v655 = vpop.f32.mrb[0].mxu0
    %656 = vmatprep.mubr.f32.mxu0 0.0
    %657 = vmatmul.mubr.f32.gmra.mrb[0].mxu0 %v275
    %v658 = vpop.f32.mrb[0].mxu0
    %v659 = vadd.f32 0.0, %v658
    %v660 = vpop.f32.mrb[0].mxu0
    %661 = vdwg.mxu0
    %662 = vst [vmem:[#allocation2] sm:$0xff] %v344
    %663 = vst [vmem:[#allocation2 + $0x8] sm:$0xff] %v349
    %664 = vst [vmem:[#allocation2 + $0x10] sm:$0xff] %v354
    %665 = vst [vmem:[#allocation2 + $0x18] sm:$0xff] %v359
    %666 = vst [vmem:[#allocation2 + $0x20] sm:$0xff] %v364
    %667 = vst [vmem:[#allocation2 + $0x28] sm:$0xff] %v369
    %668 = vst [vmem:[#allocation2 + $0x30] sm:$0xff] %v374
    %669 = vst [vmem:[#allocation2 + $0x38] sm:$0xff] %v379
    %670 = vst [vmem:[#allocation2 + $0x40] sm:$0xff] %v384
    %671 = vst [vmem:[#allocation2 + $0x48] sm:$0xff] %v389
    %672 = vst [vmem:[#allocation2 + $0x50] sm:$0xff] %v394
    %673 = vst [vmem:[#allocation2 + $0x58] sm:$0xff] %v399
    %674 = vst [vmem:[#allocation2 + $0x60] sm:$0xff] %v404
    %675 = vst [vmem:[#allocation2 + $0x68] sm:$0xff] %v409
    %676 = vst [vmem:[#allocation2 + $0x70] sm:$0xff] %v414
    %677 = vst [vmem:[#allocation2 + $0x78] sm:$0xff] %v419
    %678 = vst [vmem:[#allocation2 + $0x80] sm:$0xff] %v424
    %679 = vst [vmem:[#allocation2 + $0x88] sm:$0xff] %v429
    %680 = vst [vmem:[#allocation2 + $0x90] sm:$0xff] %v434
    %681 = vst [vmem:[#allocation2 + $0x98] sm:$0xff] %v439
    %682 = vst [vmem:[#allocation2 + $0xa0] sm:$0xff] %v444
    %683 = vst [vmem:[#allocation2 + $0xa8] sm:$0xff] %v449
    %684 = vst [vmem:[#allocation2 + $0xb0] sm:$0xff] %v454
    %685 = vst [vmem:[#allocation2 + $0xb8] sm:$0xff] %v459
    %686 = vst [vmem:[#allocation2 + $0xc0] sm:$0xff] %v464
    %687 = vst [vmem:[#allocation2 + $0xc8] sm:$0xff] %v469
    %688 = vst [vmem:[#allocation2 + $0xd0] sm:$0xff] %v474
    %689 = vst [vmem:[#allocation2 + $0xd8] sm:$0xff] %v479
    %690 = vst [vmem:[#allocation2 + $0xe0] sm:$0xff] %v484
    %691 = vst [vmem:[#allocation2 + $0xe8] sm:$0xff] %v489
    %692 = vst [vmem:[#allocation2 + $0xf0] sm:$0xff] %v494
    %693 = vst [vmem:[#allocation2 + $0xf8] sm:$0xff] %v499
    %694 = vst [vmem:[#allocation2 + $0x100] sm:$0xff] %v504
    %695 = vst [vmem:[#allocation2 + $0x108] sm:$0xff] %v509
    %696 = vst [vmem:[#allocation2 + $0x110] sm:$0xff] %v514
    %697 = vst [vmem:[#allocation2 + $0x118] sm:$0xff] %v519
    %698 = vst [vmem:[#allocation2 + $0x120] sm:$0xff] %v524
    %699 = vst [vmem:[#allocation2 + $0x128] sm:$0xff] %v529
    %700 = vst [vmem:[#allocation2 + $0x130] sm:$0xff] %v534
    %701 = vst [vmem:[#allocation2 + $0x138] sm:$0xff] %v539
    %702 = vst [vmem:[#allocation2 + $0x140] sm:$0xff] %v544
    %703 = vst [vmem:[#allocation2 + $0x148] sm:$0xff] %v549
    %704 = vst [vmem:[#allocation2 + $0x150] sm:$0xff] %v554
    %705 = vst [vmem:[#allocation2 + $0x158] sm:$0xff] %v559
    %706 = vst [vmem:[#allocation2 + $0x160] sm:$0xff] %v564
    %707 = vst [vmem:[#allocation2 + $0x168] sm:$0xff] %v569
    %708 = vst [vmem:[#allocation2 + $0x170] sm:$0xff] %v574
    %709 = vst [vmem:[#allocation2 + $0x178] sm:$0xff] %v579
    %710 = vst [vmem:[#allocation2 + $0x180] sm:$0xff] %v584
    %711 = vst [vmem:[#allocation2 + $0x188] sm:$0xff] %v589
    %712 = vst [vmem:[#allocation2 + $0x190] sm:$0xff] %v594
    %713 = vst [vmem:[#allocation2 + $0x198] sm:$0xff] %v599
    %714 = vst [vmem:[#allocation2 + $0x1a0] sm:$0xff] %v604
    %715 = vst [vmem:[#allocation2 + $0x1a8] sm:$0xff] %v609
    %716 = vst [vmem:[#allocation2 + $0x1b0] sm:$0xff] %v614
    %717 = vst [vmem:[#allocation2 + $0x1b8] sm:$0xff] %v619
    %718 = vst [vmem:[#allocation2 + $0x1c0] sm:$0xff] %v624
    %719 = vst [vmem:[#allocation2 + $0x1c8] sm:$0xff] %v629
    %720 = vst [vmem:[#allocation2 + $0x1d0] sm:$0xff] %v634
    %721 = vst [vmem:[#allocation2 + $0x1d8] sm:$0xff] %v639
    %722 = vst [vmem:[#allocation2 + $0x1e0] sm:$0xff] %v644
    %723 = vst [vmem:[#allocation2 + $0x1e8] sm:$0xff] %v649
    %724 = vst [vmem:[#allocation2 + $0x1f0] sm:$0xff] %v654
    %725 = vst [vmem:[#allocation2 + $0x1f8] sm:$0xff] %v659
    // Predicated region
    $region10: #{tpu_custom_call.1} parent=1 // pred_check
      _
    $region11: #{tpu_custom_call.1} parent=1 // pred_check_branch
      %727 = sbr.rel (0) target = $region13
    $region12: #{tpu_custom_call.1} parent=1 // pred_region
      %s729 = ssub.s32 8192, 8192
      %730 = vsyncadd [#allocation3], %s729
      %s731 = sshll.u32 [#allocation2], 4
      %s732 = int_to_ptr.vmem [resolvable:$true] %s731
      %737 = dma.vmem_to_hbm [thread:$0]  %s732, 8192, %s2, [#allocation3], 128, 128, 8
    $region13: #{tpu_custom_call.1} parent=1 // pred_fallthru
      _
    // Predicated region
    $region14: #{tpu_custom_call.1} parent=1 // pred_check
      _
    $region15: #{tpu_custom_call.1} parent=1 // pred_check_branch
      %739 = sbr.rel (0) target = $region17
    $region16: #{tpu_custom_call.1} parent=1 // pred_region
      %740 = dma.done [#allocation3], 8192
    $region17: #{tpu_custom_call.1} parent=1 // pred_fallthru
      _
    %741 = vsyncpa [#allocation3], 1

</llo_original>
